<compile_context>
chip_gen: v7x
topology: tpu7x:2x2x1
jax: 0.10.0
libtpu: 0.0.40
codegen_flags: <defaults>
</compile_context>

<pallas_src>
import functools

import numpy as np
import jax
import jax.numpy as jnp
from jax.experimental import pallas as pl
from jax.experimental.pallas import tpu as pltpu


def _dino_loss_kernel(inv_teacher_temp_ref, teacher_ref, student_ref,
                      center_ref, loss_ref, new_center_ref, *,
                      inv_student_temp, n_crops, n_global_crops, batch,
                      center_momentum):
    teacher_raw = teacher_ref[...].astype(jnp.float32)      # (n_global*B, D)
    student_raw = student_ref[...].astype(jnp.float32)      # (n_crops*B, D)
    center = center_ref[...].astype(jnp.float32)            # (1, D)
    inv_tt = inv_teacher_temp_ref[0]                        # scalar (SMEM)

    # ---- teacher: softmax((x - center) / teacher_temp), computed once per row
    t_logits = (teacher_raw - center) * inv_tt
    t_max = jnp.max(t_logits, axis=-1, keepdims=True)
    t_exp = jnp.exp(t_logits - t_max)
    t_den = jnp.sum(t_exp, axis=-1, keepdims=True)          # (rows, 1)
    t_soft = t_exp * (1.0 / t_den)                          # row-wise reciprocal

    # ---- student: log_softmax(x / student_temp), computed once per row
    s_logits = student_raw * inv_student_temp
    s_max = jnp.max(s_logits, axis=-1, keepdims=True)
    s_shift = s_logits - s_max
    s_lse = jnp.log(jnp.sum(jnp.exp(s_shift), axis=-1, keepdims=True))
    s_logsoft = s_shift - s_lse                             # (n_crops*B, D)

    # ---- cross-entropy over all (teacher crop, student crop) pairs, t != s.
    # Accumulate the element-wise products into a single (B, D) buffer and
    # reduce once at the end (static slices are free views on values).
    acc = None
    num_losses = 0
    for t in range(n_global_crops):
        t_blk = t_soft[t * batch:(t + 1) * batch, :]
        for s in range(n_crops):
            if t == s:
                continue
            s_blk = s_logsoft[s * batch:(s + 1) * batch, :]
            prod = t_blk * s_blk
            acc = prod if acc is None else acc + prod
            num_losses += 1
    total = jnp.sum(jnp.sum(acc, axis=-1, keepdims=True), axis=0,
                    keepdims=True)                          # (1, 1)
    loss_ref[...] = -total * (1.0 / (batch * num_losses))

    # ---- center EMA update from the raw teacher outputs (fused).
    n_teacher_rows = teacher_raw.shape[0]
    batch_center = jnp.sum(teacher_raw, axis=0, keepdims=True) \
        * (1.0 / n_teacher_rows)
    new_center_ref[...] = (center * center_momentum
                           + batch_center * (1.0 - center_momentum))


def dino_loss_pallas(student_out, teacher_out, center, teacher_temp, *,
                     n_crops, n_global_crops, student_temp, center_momentum):
    """Returns (loss_scalar, new_center)."""
    n_student_rows, dim = student_out.shape
    n_teacher_rows, dim_t = teacher_out.shape
    assert dim == dim_t
    batch = n_student_rows // n_crops
    assert n_student_rows == n_crops * batch
    assert n_teacher_rows == n_global_crops * batch
    num_losses = sum(1 for t in range(n_global_crops)
                     for s in range(n_crops) if t != s)
    assert num_losses > 0

    kernel = functools.partial(
        _dino_loss_kernel,
        inv_student_temp=float(1.0 / student_temp),
        n_crops=n_crops,
        n_global_crops=n_global_crops,
        batch=batch,
        center_momentum=float(center_momentum))

    inv_tt = (1.0 / jnp.asarray(teacher_temp, jnp.float32)).reshape((1,))

    loss, new_center = pl.pallas_call(
        kernel,
        out_shape=(jax.ShapeDtypeStruct((1, 1), jnp.float32),
                   jax.ShapeDtypeStruct((1, dim), jnp.float32)),
        in_specs=[
            pl.BlockSpec(memory_space=pltpu.SMEM),   # 1/teacher_temp (1,)
            pl.BlockSpec(memory_space=pltpu.VMEM),   # teacher_out (Tg*B, D)
            pl.BlockSpec(memory_space=pltpu.VMEM),   # student_out (Nc*B, D)
            pl.BlockSpec(memory_space=pltpu.VMEM),   # center (1, D)
        ],
        out_specs=(pl.BlockSpec(memory_space=pltpu.VMEM),    # loss (1, 1)
                   pl.BlockSpec(memory_space=pltpu.VMEM)),   # new center (1, D)
    )(inv_tt, teacher_out, student_out, center)

    return loss[0, 0], new_center


def dino_loss_ref(student_out, teacher_out, center, teacher_temp,
                  *, n_crops, n_global_crops, student_temp, center_momentum):
    """Pure-JAX reference mirroring the PyTorch forward."""
    s = student_out / student_temp
    t = jax.nn.softmax((teacher_out - center) / teacher_temp, axis=-1)
    s_chunks = jnp.split(s, n_crops, axis=0)
    t_chunks = jnp.split(t, n_global_crops, axis=0)
    total, n = 0.0, 0
    for ti, tc in enumerate(t_chunks):
        for si, sc in enumerate(s_chunks):
            if ti == si:
                continue
            loss = jnp.sum(-tc * jax.nn.log_softmax(sc, axis=-1), axis=-1)
            total = total + loss.mean()
            n += 1
    total = total / n
    batch_center = jnp.sum(teacher_out, axis=0, keepdims=True) / teacher_out.shape[0]
    new_center = center * center_momentum + batch_center * (1.0 - center_momentum)
    return total, new_center


if __name__ == "__main__":
    # DINO hyper-parameters (synthetic / deterministic, small shapes)
    n_crops = 4
    n_global_crops = 2
    batch = 8
    out_dim = 128
    student_temp = 0.1
    teacher_temp = 0.04
    warmup_teacher_temp = 0.04
    warmup_teacher_temp_epochs = 5
    max_epochs = 10
    center_momentum = 0.9
    epoch = 3

    # teacher temperature schedule (same as the PyTorch __init__)
    teacher_temp_schedule = np.concatenate((
        np.linspace(warmup_teacher_temp, teacher_temp, warmup_teacher_temp_epochs),
        np.ones(max_epochs - warmup_teacher_temp_epochs) * teacher_temp,
    ))
    t_temp = float(teacher_temp_schedule[epoch])

    key = jax.random.PRNGKey(0)
    k1, k2 = jax.random.split(key)
    student_out = jax.random.normal(k1, (n_crops * batch, out_dim), jnp.float32)
    teacher_out = jax.random.normal(k2, (n_global_crops * batch, out_dim), jnp.float32)
    center = jnp.zeros((1, out_dim), jnp.float32)  # register_buffer init

    loss, new_center = dino_loss_pallas(
        student_out, teacher_out, center, t_temp,
        n_crops=n_crops, n_global_crops=n_global_crops,
        student_temp=student_temp, center_momentum=center_momentum)
    jax.block_until_ready((loss, new_center))

    ref_loss, ref_center = dino_loss_ref(
        student_out, teacher_out, center, t_temp,
        n_crops=n_crops, n_global_crops=n_global_crops,
        student_temp=student_temp, center_momentum=center_momentum)

    np.testing.assert_allclose(np.asarray(loss), np.asarray(ref_loss),
                               rtol=1e-4, atol=1e-4)
    np.testing.assert_allclose(np.asarray(new_center), np.asarray(ref_center),
                               rtol=1e-4, atol=1e-5)

    # TODO(synk): the PyTorch module also stashes self.teacher_distrib /
    # self.student_distrib (numpy side-effect diagnostics); not reproduced.
    print("KERNEL_OK")
</pallas_src>

<mosaic_0001>
module attributes {stable_mosaic.version = 11 : i64} {
  func.func @_dino_loss_kernel(%arg0: memref<1xf32, #tpu.memory_space<smem>>, %arg1: memref<16x128xf32, #tpu.memory_space<vmem>>, %arg2: memref<32x128xf32, #tpu.memory_space<vmem>>, %arg3: memref<1x128xf32, #tpu.memory_space<vmem>>, %arg4: memref<1x1xf32, #tpu.memory_space<vmem>>, %arg5: memref<1x128xf32, #tpu.memory_space<vmem>>) attributes {dimension_semantics = [], scalar_prefetch = 0 : i64, scratch_operands = 0 : i64, tpu.core_type = #tpu.core_type<tc>} {
    %c0 = arith.constant 0 : index
    %c0_0 = arith.constant 0 : index
    %0 = vector.load %arg1[%c0, %c0_0] : memref<16x128xf32, #tpu.memory_space<vmem>>, vector<16x128xf32>
    %c0_1 = arith.constant 0 : index
    %c0_2 = arith.constant 0 : index
    %1 = vector.load %arg2[%c0_1, %c0_2] : memref<32x128xf32, #tpu.memory_space<vmem>>, vector<32x128xf32>
    %c0_3 = arith.constant 0 : index
    %c0_4 = arith.constant 0 : index
    %2 = vector.load %arg3[%c0_3, %c0_4] : memref<1x128xf32, #tpu.memory_space<vmem>>, vector<1x128xf32>
    %c0_5 = arith.constant 0 : index
    %3 = memref.load %arg0[%c0_5] : memref<1xf32, #tpu.memory_space<smem>>
    %4 = vector.broadcast %2 : vector<1x128xf32> to vector<16x128xf32>
    %5 = arith.subf %0, %4 : vector<16x128xf32>
    %6 = vector.broadcast %3 : f32 to vector<16x128xf32>
    %7 = arith.mulf %5, %6 : vector<16x128xf32>
    %cst = arith.constant dense<0xFF800000> : vector<16xf32>
    %8 = vector.multi_reduction <maximumf>, %7, %cst [1] : vector<16x128xf32> to vector<16xf32>
    %9 = vector.shape_cast %8 : vector<16xf32> to vector<16x1xf32>
    %10 = vector.broadcast %9 : vector<16x1xf32> to vector<16x128xf32>
    %11 = arith.subf %7, %10 : vector<16x128xf32>
    %12 = math.exp %11 : vector<16x128xf32>
    %cst_6 = arith.constant dense<0.000000e+00> : vector<16xf32>
    %13 = vector.multi_reduction <add>, %12, %cst_6 [1] : vector<16x128xf32> to vector<16xf32>
    %14 = vector.shape_cast %13 : vector<16xf32> to vector<16x1xf32>
    %cst_7 = arith.constant 1.000000e+00 : f32
    %15 = vector.broadcast %cst_7 : f32 to vector<16x1xf32>
    %16 = arith.divf %15, %14 : vector<16x1xf32>
    %17 = vector.broadcast %16 : vector<16x1xf32> to vector<16x128xf32>
    %18 = arith.mulf %12, %17 : vector<16x128xf32>
    %cst_8 = arith.constant 1.000000e+01 : f32
    %19 = vector.broadcast %cst_8 : f32 to vector<32x128xf32>
    %20 = arith.mulf %1, %19 : vector<32x128xf32>
    %cst_9 = arith.constant dense<0xFF800000> : vector<32xf32>
    %21 = vector.multi_reduction <maximumf>, %20, %cst_9 [1] : vector<32x128xf32> to vector<32xf32>
    %22 = vector.shape_cast %21 : vector<32xf32> to vector<32x1xf32>
    %23 = vector.broadcast %22 : vector<32x1xf32> to vector<32x128xf32>
    %24 = arith.subf %20, %23 : vector<32x128xf32>
    %25 = math.exp %24 : vector<32x128xf32>
    %cst_10 = arith.constant dense<0.000000e+00> : vector<32xf32>
    %26 = vector.multi_reduction <add>, %25, %cst_10 [1] : vector<32x128xf32> to vector<32xf32>
    %27 = vector.shape_cast %26 : vector<32xf32> to vector<32x1xf32>
    %28 = math.log %27 : vector<32x1xf32>
    %29 = vector.broadcast %28 : vector<32x1xf32> to vector<32x128xf32>
    %30 = arith.subf %24, %29 : vector<32x128xf32>
    %31 = vector.extract_strided_slice %18 {offsets = [0, 0], sizes = [8, 128], strides = [1, 1]} : vector<16x128xf32> to vector<8x128xf32>
    %32 = vector.extract_strided_slice %30 {offsets = [8, 0], sizes = [8, 128], strides = [1, 1]} : vector<32x128xf32> to vector<8x128xf32>
    %33 = arith.mulf %31, %32 : vector<8x128xf32>
    %34 = vector.extract_strided_slice %30 {offsets = [16, 0], sizes = [8, 128], strides = [1, 1]} : vector<32x128xf32> to vector<8x128xf32>
    %35 = arith.mulf %31, %34 : vector<8x128xf32>
    %36 = arith.addf %33, %35 : vector<8x128xf32>
    %37 = vector.extract_strided_slice %30 {offsets = [24, 0], sizes = [8, 128], strides = [1, 1]} : vector<32x128xf32> to vector<8x128xf32>
    %38 = arith.mulf %31, %37 : vector<8x128xf32>
    %39 = arith.addf %36, %38 : vector<8x128xf32>
    %40 = vector.extract_strided_slice %18 {offsets = [8, 0], sizes = [8, 128], strides = [1, 1]} : vector<16x128xf32> to vector<8x128xf32>
    %41 = vector.extract_strided_slice %30 {offsets = [0, 0], sizes = [8, 128], strides = [1, 1]} : vector<32x128xf32> to vector<8x128xf32>
    %42 = arith.mulf %40, %41 : vector<8x128xf32>
    %43 = arith.addf %39, %42 : vector<8x128xf32>
    %44 = vector.extract_strided_slice %30 {offsets = [16, 0], sizes = [8, 128], strides = [1, 1]} : vector<32x128xf32> to vector<8x128xf32>
    %45 = arith.mulf %40, %44 : vector<8x128xf32>
    %46 = arith.addf %43, %45 : vector<8x128xf32>
    %47 = vector.extract_strided_slice %30 {offsets = [24, 0], sizes = [8, 128], strides = [1, 1]} : vector<32x128xf32> to vector<8x128xf32>
    %48 = arith.mulf %40, %47 : vector<8x128xf32>
    %49 = arith.addf %46, %48 : vector<8x128xf32>
    %cst_11 = arith.constant dense<0.000000e+00> : vector<8xf32>
    %50 = vector.multi_reduction <add>, %49, %cst_11 [1] : vector<8x128xf32> to vector<8xf32>
    %51 = vector.shape_cast %50 : vector<8xf32> to vector<8x1xf32>
    %cst_12 = arith.constant dense<0.000000e+00> : vector<1xf32>
    %52 = vector.multi_reduction <add>, %51, %cst_12 [0] : vector<8x1xf32> to vector<1xf32>
    %53 = vector.shape_cast %52 : vector<1xf32> to vector<1x1xf32>
    %cst_13 = arith.constant 0.000000e+00 : f32
    %54 = vector.broadcast %cst_13 : f32 to vector<1x1xf32>
    %55 = arith.subf %54, %53 : vector<1x1xf32>
    %cst_14 = arith.constant 0.020833334 : f32
    %56 = vector.broadcast %cst_14 : f32 to vector<1x1xf32>
    %57 = arith.mulf %55, %56 : vector<1x1xf32>
    %c0_15 = arith.constant 0 : index
    %c0_16 = arith.constant 0 : index
    %58 = vector.load %arg4[%c0_15, %c0_16] : memref<1x1xf32, #tpu.memory_space<vmem>>, vector<1x1xf32>
    tpu.vector_store %arg4[%c0_15, %c0_16], %57 {strides = array<i32>} : memref<1x1xf32, #tpu.memory_space<vmem>>, vector<1x1xf32>,
    %cst_17 = arith.constant dense<0.000000e+00> : vector<128xf32>
    %59 = vector.multi_reduction <add>, %0, %cst_17 [0] : vector<16x128xf32> to vector<128xf32>
    %60 = vector.shape_cast %59 : vector<128xf32> to vector<1x128xf32>
    %cst_18 = arith.constant 6.250000e-02 : f32
    %61 = vector.broadcast %cst_18 : f32 to vector<1x128xf32>
    %62 = arith.mulf %60, %61 : vector<1x128xf32>
    %cst_19 = arith.constant 0.899999976 : f32
    %63 = vector.broadcast %cst_19 : f32 to vector<1x128xf32>
    %64 = arith.mulf %2, %63 : vector<1x128xf32>
    %cst_20 = arith.constant 1.000000e-01 : f32
    %65 = vector.broadcast %cst_20 : f32 to vector<1x128xf32>
    %66 = arith.mulf %62, %65 : vector<1x128xf32>
    %67 = arith.addf %64, %66 : vector<1x128xf32>
    %c0_21 = arith.constant 0 : index
    %c0_22 = arith.constant 0 : index
    %68 = vector.load %arg5[%c0_21, %c0_22] : memref<1x128xf32, #tpu.memory_space<vmem>>, vector<1x128xf32>
    tpu.vector_store %arg5[%c0_21, %c0_22], %67 {strides = array<i32>} : memref<1x128xf32, #tpu.memory_space<vmem>>, vector<1x128xf32>,
    return
  }
}

</mosaic_0001>

<llo_original>
// kernel: tpu_custom_call.1
$region0: #{tpu_custom_call.1}
  #allocation0 [shape = 'u32[]', space=smem, size = 0x4, offset = 0x4, fixed_abs, tag = 'smem constant byte address 0x4 - core index']
  #allocation1 [shape = 'u32[144,128]{1,0:T(1,128)}', space=vmem, size = 0x12000, scoped, tag = 'internal scratch']
  #allocation2 [shape = 'f32[1]{0:T(128)S(6)}', space=smem, size = 0x200, scoped, tag = 'scoped memory for tpu_custom_call.1']
  %s0 = inlined_call_operand.<no memory space> [shape: f32[1], index: 0, kind: input, shape index: {}]
  %s1 = inlined_call_operand.hbm [shape: f32[16,128], index: 1, kind: input, shape index: {}]
  %s2 = inlined_call_operand.hbm [shape: f32[32,128], index: 2, kind: input, shape index: {}]
  %s3 = inlined_call_operand.vmem [shape: f32[1,128], index: 3, kind: input, shape index: {}]
  %s4 = inlined_call_operand.hbm [shape: f32[1,1], index: 4, kind: output, shape index: {0}]
  %s5 = inlined_call_operand.hbm [shape: f32[1,128], index: 5, kind: output, shape index: {1}]
  %6 = xla_tuple %s4, %s5
  %s7 = sld [smem:[#allocation0]]
  $region42: #{tpu_custom_call.1} parent=0
    _
  %s9 = ssub.s32 1, %s7
  %s10 = scalar_select 0, %s9, %s7
  %11 = sst [smem:[#allocation2]] %s0
  $region1: #{tpu_custom_call.1} parent=0
    #allocation3 [shape = 'u8[8192]{0}', space=vmem, size = 0x2000, scoped, tag = 'input window, operand 1, single buffered']
    #allocation4 [shape = 's32[1]{0}', space=sflag, size = 0x4, scoped, tag = 'scoped memory for tpu_custom_call.1']
    #allocation5 [shape = 's32[1]{0}', space=sflag, size = 0x4, scoped, tag = 'scoped memory for tpu_custom_call.1']
    #allocation6 [shape = 'u8[16384]{0}', space=vmem, size = 0x4000, scoped, tag = 'input window, operand 2, single buffered']
    #allocation7 [shape = 's32[1]{0}', space=sflag, size = 0x4, scoped, tag = 'scoped memory for tpu_custom_call.1']
    #allocation8 [shape = 'u8[512]{0}', space=vmem, size = 0x400, scoped, tag = 'output window, operand 0, single buffered']
    #allocation9 [shape = 'u8[512]{0}', space=vmem, size = 0x400, scoped, tag = 'output window, operand 1, single buffered']
    #allocation10 [shape = 's32[1]{0}', space=sflag, size = 0x4, scoped, tag = 'scoped memory for tpu_custom_call.1']
    %12 = vsyncpa [#allocation4], 0
    %13 = vsyncpa [#allocation7], 0
    %14 = vsyncpa [#allocation5], 0
    %15 = vsyncpa [#allocation10], 0
    // Predicated region
    $region2: #{tpu_custom_call.1} parent=1 // pred_check
      _
    $region3: #{tpu_custom_call.1} parent=1 // pred_check_branch
      %17 = sbr.rel (0) target = $region5
    $region4: #{tpu_custom_call.1} parent=1 // pred_region
      _
    $region5: #{tpu_custom_call.1} parent=1 // pred_fallthru
      _
    // Predicated region
    $region6: #{tpu_custom_call.1} parent=1 // pred_check
      _
    $region7: #{tpu_custom_call.1} parent=1 // pred_check_branch
      %19 = sbr.rel (0) target = $region9
    $region8: #{tpu_custom_call.1} parent=1 // pred_region
      %s21 = ssub.s32 256, 256
      %22 = vsyncadd [#allocation4], %s21
      %s23 = sshll.u32 [#allocation3], 4
      %s24 = int_to_ptr.vmem [resolvable:$true] %s23
      %29 = dma.hbm_to_vmem [thread:$0]  %s1, 256, %s24, [#allocation4], 128, 128, 8
    $region9: #{tpu_custom_call.1} parent=1 // pred_fallthru
      _
    // Predicated region
    $region10: #{tpu_custom_call.1} parent=1 // pred_check
      _
    $region11: #{tpu_custom_call.1} parent=1 // pred_check_branch
      %31 = sbr.rel (0) target = $region13
    $region12: #{tpu_custom_call.1} parent=1 // pred_region
      %s33 = ssub.s32 512, 512
      %34 = vsyncadd [#allocation7], %s33
      %s35 = sshll.u32 [#allocation6], 4
      %s36 = int_to_ptr.vmem [resolvable:$true] %s35
      %41 = dma.hbm_to_vmem [thread:$0]  %s2, 512, %s36, [#allocation7], 128, 128, 8
    $region13: #{tpu_custom_call.1} parent=1 // pred_fallthru
      _
    // Predicated region
    $region14: #{tpu_custom_call.1} parent=1 // pred_check
      _
    $region15: #{tpu_custom_call.1} parent=1 // pred_check_branch
      %43 = sbr.rel (0) target = $region17
    $region16: #{tpu_custom_call.1} parent=1 // pred_region
      _
    $region17: #{tpu_custom_call.1} parent=1 // pred_fallthru
      _
    // Predicated region
    $region18: #{tpu_custom_call.1} parent=1 // pred_check
      _
    $region19: #{tpu_custom_call.1} parent=1 // pred_check_branch
      %45 = sbr.rel (0) target = $region21
    $region20: #{tpu_custom_call.1} parent=1 // pred_region
      %46 = dma.done [#allocation4], 256
    $region21: #{tpu_custom_call.1} parent=1 // pred_fallthru
      _
    // Predicated region
    $region22: #{tpu_custom_call.1} parent=1 // pred_check
      _
    $region23: #{tpu_custom_call.1} parent=1 // pred_check_branch
      %48 = sbr.rel (0) target = $region25
    $region24: #{tpu_custom_call.1} parent=1 // pred_region
      %49 = dma.done [#allocation7], 512
    $region25: #{tpu_custom_call.1} parent=1 // pred_fallthru
      _
    %v50 = vld [vmem:[#allocation3] sm:$0xff]
    %v51 = vld [vmem:[#allocation3 + $0x8] sm:$0xff]
    %v52 = vld [vmem:[#allocation6] sm:$0xff]
    %v53 = vld [vmem:[#allocation6 + $0x8] sm:$0xff]
    %v54 = vld [vmem:[#allocation6 + $0x10] sm:$0xff]
    %v55 = vld [vmem:[#allocation6 + $0x18] sm:$0xff]
    %v56 = vld [vmem:[%s3] sm:$0x1]
    %s57 = sld [smem:[#allocation2]]
    %v59 = vlaneseq
    %v60 = vshrl.u32 %v59, 7
    %v61 = vsub.s32 0, %v60
    %v62 = vrot.slane %v56, %v61
    %v64 = vsub.f32 %v50, %v62
    %v65 = vsub.f32 %v51, %v62
    %v66 = vstv %s57
    %v67 = vmul.f32 %v64, %v66
    %v68 = vmul.f32 %v65, %v66
    %69 = vmax.xlane.f32.xlu0 %v67
    %v70 = vpop.xlane.xlu0 %69
    %71 = vmax.xlane.f32.xlu0 %v68
    %v72 = vpop.xlane.xlu0 %71
    %v73 = vsub.f32 %v67, %v70
    %v74 = vsub.f32 %v68, %v72
    %v75 = vmul.f32 %v73, 1.442695
    %v76 = vpow.pop %v75
    %v77 = vmul.f32 %v74, 1.442695
    %v78 = vpow.pop %v77
    %79 = vadd.xlane.f32.xlu0 %v76
    %v80 = vpop.xlane.xlu0 %79
    %81 = vadd.xlane.f32.xlu0 %v78
    %v82 = vpop.xlane.xlu0 %81
    %v83 = vrcp.pop %v80
    %v84 = vmul.f32 1.0, %v83
    %v85 = vrcp.pop %v82
    %v86 = vmul.f32 1.0, %v85
    %v87 = vmul.f32 %v76, %v84
    %v88 = vmul.f32 %v78, %v86
    %v89 = vmul.f32 %v52, 10.0
    %v90 = vmul.f32 %v53, 10.0
    %v91 = vmul.f32 %v54, 10.0
    %v92 = vmul.f32 %v55, 10.0
    %93 = vmax.xlane.f32.xlu0 %v89
    %v94 = vpop.xlane.xlu0 %93
    %95 = vmax.xlane.f32.xlu0 %v90
    %v96 = vpop.xlane.xlu0 %95
    %97 = vmax.xlane.f32.xlu0 %v91
    %v98 = vpop.xlane.xlu0 %97
    %99 = vmax.xlane.f32.xlu0 %v92
    %v100 = vpop.xlane.xlu0 %99
    %v101 = vsub.f32 %v89, %v94
    %v102 = vsub.f32 %v90, %v96
    %v103 = vsub.f32 %v91, %v98
    %v104 = vsub.f32 %v92, %v100
    %v105 = vmul.f32 %v101, 1.442695
    %v106 = vpow.pop %v105
    %v107 = vmul.f32 %v102, 1.442695
    %v108 = vpow.pop %v107
    %v109 = vmul.f32 %v103, 1.442695
    %v110 = vpow.pop %v109
    %v111 = vmul.f32 %v104, 1.442695
    %v112 = vpow.pop %v111
    %113 = vadd.xlane.f32.xlu0 %v106
    %v114 = vpop.xlane.xlu0 %113
    %115 = vadd.xlane.f32.xlu0 %v108
    %v116 = vpop.xlane.xlu0 %115
    %117 = vadd.xlane.f32.xlu0 %v110
    %v118 = vpop.xlane.xlu0 %117
    %119 = vadd.xlane.f32.xlu0 %v112
    %v120 = vpop.xlane.xlu0 %119
    %v121 = vlog2.pop %v114
    %v122 = vmul.f32 %v121, 0.6931472
    %v123 = vlog2.pop %v116
    %v124 = vmul.f32 %v123, 0.6931472
    %v125 = vlog2.pop %v118
    %v126 = vmul.f32 %v125, 0.6931472
    %v127 = vlog2.pop %v120
    %v128 = vmul.f32 %v127, 0.6931472
    %v129 = vsub.f32 %v101, %v122
    %v130 = vsub.f32 %v102, %v124
    %v131 = vsub.f32 %v103, %v126
    %v132 = vsub.f32 %v104, %v128
    %v133 = vmul.f32 %v87, %v130
    %v134 = vmul.f32 %v87, %v131
    %v135 = vadd.f32 %v133, %v134
    %v136 = vmul.f32 %v87, %v132
    %v137 = vadd.f32 %v135, %v136
    %v138 = vmul.f32 %v88, %v129
    %v139 = vadd.f32 %v137, %v138
    %v140 = vmul.f32 %v88, %v131
    %v141 = vadd.f32 %v139, %v140
    %v142 = vmul.f32 %v88, %v132
    %v143 = vadd.f32 %v141, %v142
    %144 = vadd.xlane.f32.xlu0 %v143
    %v145 = vpop.xlane.xlu0 %144
    %v146 = vrot.slane %v145, 4
    %v147 = vadd.f32 %v145, %v146
    %v148 = vrot.slane %v147, 2
    %v149 = vadd.f32 %v147, %v148
    %v150 = vrot.slane %v149, 1
    %v151 = vadd.f32 %v149, %v150
    %v152 = vsub.f32 0.0, %v151
    %v153 = vmul.f32 %v152, 0.020833334
    %vm154 = vcmask 0
    %155 = vst.msk [vmem:[#allocation8] sm:$0x1] %vm154, %v153
    %v156 = vadd.f32 %v50, %v51
    %v157 = vrot.slane %v156, 4
    %v158 = vadd.f32 %v156, %v157
    %v159 = vrot.slane %v158, 2
    %v160 = vadd.f32 %v158, %v159
    %v161 = vrot.slane %v160, 1
    %v162 = vadd.f32 %v160, %v161
    %v163 = vmul.f32 %v162, 0.0625
    %v164 = vmul.f32 %v56, 0.9
    %v165 = vmul.f32 %v163, 0.1
    %v166 = vadd.f32 %v164, %v165
    %167 = vst [vmem:[#allocation9] sm:$0x1] %v166
    // Predicated region
    $region26: #{tpu_custom_call.1} parent=1 // pred_check
      _
    $region27: #{tpu_custom_call.1} parent=1 // pred_check_branch
      %169 = sbr.rel (0) target = $region29
    $region28: #{tpu_custom_call.1} parent=1 // pred_region
      %s171 = ssub.s32 16, 16
      %172 = vsyncadd [#allocation5], %s171
      %s174 = sshll.u32 [#allocation8], 4
      %s175 = int_to_ptr.vmem [resolvable:$true] %s174
      %177 = dma.vmem_to_hbm [thread:$0]  %s175, 16, %s4, [#allocation5]
    $region29: #{tpu_custom_call.1} parent=1 // pred_fallthru
      _
    // Predicated region
    $region30: #{tpu_custom_call.1} parent=1 // pred_check
      _
    $region31: #{tpu_custom_call.1} parent=1 // pred_check_branch
      %179 = sbr.rel (0) target = $region33
    $region32: #{tpu_custom_call.1} parent=1 // pred_region
      %s181 = ssub.s32 16, 16
      %182 = vsyncadd [#allocation10], %s181
      %s184 = sshll.u32 [#allocation9], 4
      %s185 = int_to_ptr.vmem [resolvable:$true] %s184
      %187 = dma.vmem_to_hbm [thread:$0]  %s185, 16, %s5, [#allocation10]
    $region33: #{tpu_custom_call.1} parent=1 // pred_fallthru
      _
    // Predicated region
    $region34: #{tpu_custom_call.1} parent=1 // pred_check
      _
    $region35: #{tpu_custom_call.1} parent=1 // pred_check_branch
      %189 = sbr.rel (0) target = $region37
    $region36: #{tpu_custom_call.1} parent=1 // pred_region
      %190 = dma.done [#allocation5], 16
    $region37: #{tpu_custom_call.1} parent=1 // pred_fallthru
      _
    // Predicated region
    $region38: #{tpu_custom_call.1} parent=1 // pred_check
      _
    $region39: #{tpu_custom_call.1} parent=1 // pred_check_branch
      %192 = sbr.rel (0) target = $region41
    $region40: #{tpu_custom_call.1} parent=1 // pred_region
      %193 = dma.done [#allocation10], 16
    $region41: #{tpu_custom_call.1} parent=1 // pred_fallthru
      _
    %194 = vsyncpa [#allocation4], 1
    %195 = vsyncpa [#allocation7], 1
    %196 = vsyncpa [#allocation5], 1
    %197 = vsyncpa [#allocation10], 1

</llo_original>
